<compile_context>
chip_gen: v6e
topology: v6e:2x2x1
jax: 0.10.0
libtpu: 0.0.40
codegen_flags: <defaults>
</compile_context>

<pallas_src>
import math
import functools

import jax
import jax.numpy as jnp
from jax.experimental import pallas as pl
from jax.experimental.pallas import tpu as pltpu


def _flash_qkv_kernel(q_ref, k_ref, v_ref, o_ref, m_ref, l_ref, acc_ref, *,
                      ch, compute_dtype, approx_recip):
    """One (head-block, q-tile, kv-tile) grid step.

    q_ref : (BH, C, TQ)    pre-scaled by 1/sqrt(C), already compute dtype
    k_ref : (BH, C, TK)    compute dtype
    v_ref : (BH, C+1, TK)  compute dtype; row C is 1 on real keys, 0 on padded
                           keys, so one matmul yields numerator AND denominator
                           and padded keys contribute exactly zero.
    o_ref : (BH, C, TQ)
    m_ref, l_ref : (BH, 1, TQ) fp32 running max / denominator (VMEM scratch)
    acc_ref      : (BH, C, TQ) fp32 running numerator          (VMEM scratch)
    """
    ki = pl.program_id(2)

    @pl.when(ki == 0)
    def _init():
        m_ref[...] = jnp.full(m_ref.shape, -jnp.inf, dtype=jnp.float32)
        l_ref[...] = jnp.zeros(l_ref.shape, dtype=jnp.float32)
        acc_ref[...] = jnp.zeros(acc_ref.shape, dtype=jnp.float32)

    num_heads_in_block = q_ref.shape[0]
    for h in range(num_heads_in_block):       # static unroll, wrapper caps bh <= 8
        q = q_ref[h]                          # (C, TQ)  no per-step scale/cast
        k = k_ref[h]                          # (C, TK)
        v = v_ref[h]                          # (C+1, TK)

        # scores[s, t] = sum_c k[c, s] * q[c, t]  ->  (TK, TQ), fp32 accumulation.
        # Only the small (C, .) operands are contracted; the big tile is never moved.
        s = jax.lax.dot_general(k, q, (((0,), (0,)), ((), ())),
                                preferred_element_type=jnp.float32)

        m_prev = m_ref[h]                                         # (1, TQ)
        m_new = jnp.maximum(m_prev, jnp.max(s, axis=0, keepdims=True))
        alpha = jnp.exp(m_prev - m_new)                           # (1, TQ)
        p = jnp.exp(s - m_new).astype(compute_dtype)              # (TK, TQ)

        # One MXU matmul gives the numerator (rows :C) AND sum_s p[s, t]
        # (row C, via the ones row of v) -- no separate reduce pass over p.
        pv = jax.lax.dot_general(v, p, (((1,), (0,)), ((), ())),
                                 preferred_element_type=jnp.float32)  # (C+1, TQ)

        m_ref[h] = m_new
        l_ref[h] = alpha * l_ref[h] + pv[ch:ch + 1]
        acc_ref[h] = alpha * acc_ref[h] + pv[:ch]

    @pl.when(ki == pl.num_programs(2) - 1)
    def _finalize():
        inv_l = pl.reciprocal(l_ref[...], approx=approx_recip)    # (BH, 1, TQ)
        o_ref[...] = (acc_ref[...] * inv_l).astype(o_ref.dtype)


def _choose_seq_block(t_pad, preferred):
    """Largest multiple-of-128 divisor of t_pad that is <= preferred, or t_pad
    itself when t_pad <= preferred (full-extent block)."""
    if t_pad <= preferred:
        return t_pad
    blk = (preferred // 128) * 128
    while blk >= 128:
        if t_pad % blk == 0:
            return blk
        blk -= 128
    return t_pad


def _choose_head_block(num_bh, length, ch, q_tiles):
    """Heads per grid step: >=2 where possible (overlaps MXU/EUP chains for the
    C<=64 case), more for short sequences to amortize per-step overhead, capped
    at 8 to bound the static unroll, and reduced if needed so the parallel grid
    has >= 2 blocks (v7x megacore)."""
    if length >= 512:
        target = 2 if ch <= 64 else 1
    else:
        target = max(1, min(8, 512 // max(length, 1)))
    if q_tiles < 2:
        # keep (num_bh // bh) * q_tiles >= 2 so both v7x TensorCores get work
        target = min(target, max(1, num_bh // 2))
    best = 1
    for d in range(1, num_bh + 1):
        if num_bh % d == 0 and d <= target:
            best = d
    return best


def _vmem_limit_bytes(bh, ch, bq, bk, in_bytes, out_bytes):
    """Derive a scoped-VMEM request from actual tile sizes (double-buffered
    inputs/outputs + fp32 scratch + a generous allowance for the (bk, bq)
    score/p working set), capped at 48 MiB to leave v7x headroom."""
    tiles = 2 * bh * (ch * bq + ch * bk + (ch + 1) * bk) * in_bytes   # inputs x2
    tiles += 2 * bh * ch * bq * out_bytes                             # output x2
    tiles += bh * ch * bq * 4 + 2 * bh * 8 * bq * 4                   # acc + m/l
    internal = 6 * bk * bq * 4                                        # score/p fp32
    limit = 2 * (tiles + internal) + (8 << 20)
    return int(max(32 << 20, min(limit, 48 << 20)))


def qkv_attention_legacy(qkv, n_heads, *, block_q=512, block_k=1024,
                         block_h=None, use_bf16_matmul=True,
                         approx_reciprocal=False):
    """JAX/Pallas equivalent of QKVAttentionLegacy.forward.

    :param qkv: [N, H*3*C, T] array of packed Qs, Ks and Vs.
    :param n_heads: number of attention heads H.
    :param block_q / block_k: preferred query / key tile sizes.
    :param block_h: (batch*head) slices per grid step (auto if None).
    :param use_bf16_matmul: feed the MXU bf16 operands (fp32 accumulation).
    :param approx_reciprocal: EUP approximate reciprocal for 1/sum(exp).
    :return: [N, H*C, T] array (same dtype as qkv).
    """
    bs, width, length = qkv.shape
    assert width % (3 * n_heads) == 0
    ch = width // (3 * n_heads)
    b = bs * n_heads

    compute_dtype = jnp.bfloat16 if use_bf16_matmul else qkv.dtype

    # ---- sequence padding & tile selection ---------------------------------
    if length <= block_q and length <= block_k:
        t_pad = length                                # single full-extent tile
    else:
        t_pad = ((length + 127) // 128) * 128         # pad to 128-multiple
    bq = _choose_seq_block(t_pad, block_q)
    bk = _choose_seq_block(t_pad, block_k)
    q_tiles = t_pad // bq
    bh = _choose_head_block(b, length, ch, q_tiles) if block_h is None else block_h
    assert b % bh == 0 and t_pad % bq == 0 and t_pad % bk == 0

    # ---- split + scale + cast + augment once in the wrapper ----------------
    # (single fused XLA pass over qkv; K/V are re-streamed T/bq times by the
    # kernel so casting them here halves that HBM traffic)
    scale = 1.0 / math.sqrt(ch)
    qkv_r = qkv.reshape(b, 3, ch, length)
    q = (qkv_r[:, 0].astype(jnp.float32) * scale).astype(compute_dtype)   # (b,C,T)
    k = qkv_r[:, 1].astype(compute_dtype)                                 # (b,C,T)
    v = jnp.concatenate(
        [qkv_r[:, 2], jnp.ones((b, 1, length), qkv.dtype)], axis=1
    ).astype(compute_dtype)                                               # (b,C+1,T)

    if t_pad != length:
        pad = ((0, 0), (0, 0), (0, t_pad - length))
        q = jnp.pad(q, pad)
        k = jnp.pad(k, pad)
        v = jnp.pad(v, pad)        # ones-row becomes 0 on pads -> pads contribute 0

    grid = (b // bh, q_tiles, t_pad // bk)

    kernel = functools.partial(
        _flash_qkv_kernel, ch=ch, compute_dtype=compute_dtype,
        approx_recip=approx_reciprocal)

    in_bytes = jnp.dtype(compute_dtype).itemsize
    out_bytes = jnp.dtype(qkv.dtype).itemsize
    vmem_limit = _vmem_limit_bytes(bh, ch, bq, bk, in_bytes, out_bytes)

    cost = pl.CostEstimate(
        flops=4 * b * ch * t_pad * t_pad,
        transcendentals=b * t_pad * t_pad,
        bytes_accessed=(q.size + (k.size + v.size) * q_tiles) * in_bytes
                       + b * ch * t_pad * out_bytes)

    out = pl.pallas_call(
        kernel,
        out_shape=jax.ShapeDtypeStruct((b, ch, t_pad), qkv.dtype),
        grid=grid,
        in_specs=[
            # q: index_map independent of ki -> fetched once per (head-block, q-tile)
            pl.BlockSpec((bh, ch, bq), lambda h, qi, ki: (h, 0, qi)),
            # k, v: streamed along the innermost kv axis
            pl.BlockSpec((bh, ch, bk), lambda h, qi, ki: (h, 0, ki)),
            pl.BlockSpec((bh, ch + 1, bk), lambda h, qi, ki: (h, 0, ki)),
        ],
        # Output block independent of ki -> accumulator resident across the kv sweep.
        out_specs=pl.BlockSpec((bh, ch, bq), lambda h, qi, ki: (h, 0, qi)),
        scratch_shapes=[
            pltpu.VMEM((bh, 1, bq), jnp.float32),     # running max
            pltpu.VMEM((bh, 1, bq), jnp.float32),     # running denominator
            pltpu.VMEM((bh, ch, bq), jnp.float32),    # running numerator
        ],
        compiler_params=pltpu.CompilerParams(
            dimension_semantics=("parallel", "parallel", "arbitrary"),
            vmem_limit_bytes=vmem_limit),
        cost_estimate=cost,
    )(q, k, v)

    if t_pad != length:
        out = out[:, :, :length]
    return out.reshape(bs, n_heads * ch, length)


def _reference(qkv, n_heads):
    """Pure-JAX reference mirroring the PyTorch module exactly."""
    bs, width, length = qkv.shape
    ch = width // (3 * n_heads)
    qkv_r = qkv.reshape(bs * n_heads, 3 * ch, length)
    q, k, v = qkv_r[:, :ch], qkv_r[:, ch:2 * ch], qkv_r[:, 2 * ch:]
    scale = 1 / math.sqrt(math.sqrt(ch))
    hi = jax.lax.Precision.HIGHEST
    w = jnp.einsum('bct,bcs->bts', q * scale, k * scale, precision=hi)
    w = jax.nn.softmax(w.astype(jnp.float32), axis=-1).astype(w.dtype)
    a = jnp.einsum('bts,bcs->bct', w, v, precision=hi)
    return a.reshape(bs, -1, length)


if __name__ == "__main__":
    # N=2 batch, H=2 heads, C=8 channels/head -> width = 48
    n_heads = 2
    N, C = 2, 8
    width = n_heads * 3 * C

    # 1) Tiny sequence, exact fp32 path (single full-extent tile per axis).
    T = 16
    qkv = jax.random.normal(jax.random.PRNGKey(0), (N, width, T), dtype=jnp.float32)
    out = jax.block_until_ready(
        qkv_attention_legacy(qkv, n_heads, use_bf16_matmul=False))
    ref = _reference(qkv, n_heads)
    assert out.shape == (N, n_heads * C, T), out.shape
    assert jnp.allclose(out, ref, atol=1e-3, rtol=1e-3), "fp32 mismatch vs reference"

    # 2) Tiled flash path (2 head-blocks x 2 q-tiles x 2 kv-tiles) with the
    #    default bf16 MXU operands + EUP approximate reciprocal.
    T2 = 256
    qkv2 = jax.random.normal(jax.random.PRNGKey(1), (N, width, T2), dtype=jnp.float32)
    out2 = jax.block_until_ready(
        qkv_attention_legacy(qkv2, n_heads, block_q=128, block_k=128,
                             approx_reciprocal=True))
    ref2 = _reference(qkv2, n_heads)
    assert jnp.allclose(out2, ref2, atol=5e-2, rtol=5e-2), "bf16 tiled mismatch"

    # 3) Non-128-multiple sequence: exercises the padding path (T=192 padded to
    #    256; padded keys neutralized by the zero entries of the ones-row of v).
    T3 = 192
    qkv3 = jax.random.normal(jax.random.PRNGKey(2), (N, width, T3), dtype=jnp.float32)
    out3 = jax.block_until_ready(
        qkv_attention_legacy(qkv3, n_heads, block_q=128, block_k=128,
                             use_bf16_matmul=False))
    ref3 = _reference(qkv3, n_heads)
    assert out3.shape == (N, n_heads * C, T3), out3.shape
    assert jnp.allclose(out3, ref3, atol=1e-3, rtol=1e-3), "padded fp32 mismatch"

    print("KERNEL_OK")
</pallas_src>

<mosaic_0001>
module attributes {stable_mosaic.version = 11 : i64} {
  func.func @_flash_qkv_kernel(%arg0: i32, %arg1: i32, %arg2: i32, %arg3: memref<2x8x16xf32, #tpu.memory_space<vmem>>, %arg4: memref<2x8x16xf32, #tpu.memory_space<vmem>>, %arg5: memref<2x9x16xf32, #tpu.memory_space<vmem>>, %arg6: memref<2x8x16xf32, #tpu.memory_space<vmem>>, %arg7: memref<2x1x16xf32, #tpu.memory_space<vmem>>, %arg8: memref<2x1x16xf32, #tpu.memory_space<vmem>>, %arg9: memref<2x8x16xf32, #tpu.memory_space<vmem>>) attributes {dimension_semantics = [#tpu.dimension_semantics<parallel>, #tpu.dimension_semantics<parallel>, #tpu.dimension_semantics<arbitrary>], iteration_bounds = array<i64: 2, 1, 1>, scalar_prefetch = 0 : i64, scratch_operands = 3 : i64, tpu.core_type = #tpu.core_type<tc>, window_params = [{transform_indices = @transform_0, window_bounds = array<i64: 2, 8, 16>}, {transform_indices = @transform_1, window_bounds = array<i64: 2, 8, 16>}, {transform_indices = @transform_2, window_bounds = array<i64: 2, 9, 16>}, {transform_indices = @transform_3, window_bounds = array<i64: 2, 8, 16>}]} {
    %c0_i32 = arith.constant 0 : i32
    %0 = arith.cmpi eq, %arg2, %c0_i32 : i32
    %1 = arith.extui %0 : i1 to i32
    %c0_i32_0 = arith.constant 0 : i32
    %2 = arith.cmpi ne, %1, %c0_i32_0 : i32
    scf.if %2 {
      %cst_60 = arith.constant 0xFF800000 : f32
      %82 = vector.broadcast %cst_60 : f32 to vector<2x1x16xf32>
      %c0_61 = arith.constant 0 : index
      %c0_62 = arith.constant 0 : index
      %c0_63 = arith.constant 0 : index
      %83 = vector.load %arg7[%c0_61, %c0_62, %c0_63] : memref<2x1x16xf32, #tpu.memory_space<vmem>>, vector<2x1x16xf32>
      tpu.vector_store %arg7[%c0_61, %c0_62, %c0_63], %82 {strides = array<i32>} : memref<2x1x16xf32, #tpu.memory_space<vmem>>, vector<2x1x16xf32>,
      %cst_64 = arith.constant 0.000000e+00 : f32
      %84 = vector.broadcast %cst_64 : f32 to vector<2x1x16xf32>
      %c0_65 = arith.constant 0 : index
      %c0_66 = arith.constant 0 : index
      %c0_67 = arith.constant 0 : index
      %85 = vector.load %arg8[%c0_65, %c0_66, %c0_67] : memref<2x1x16xf32, #tpu.memory_space<vmem>>, vector<2x1x16xf32>
      tpu.vector_store %arg8[%c0_65, %c0_66, %c0_67], %84 {strides = array<i32>} : memref<2x1x16xf32, #tpu.memory_space<vmem>>, vector<2x1x16xf32>,
      %cst_68 = arith.constant 0.000000e+00 : f32
      %86 = vector.broadcast %cst_68 : f32 to vector<2x8x16xf32>
      %c0_69 = arith.constant 0 : index
      %c0_70 = arith.constant 0 : index
      %c0_71 = arith.constant 0 : index
      %87 = vector.load %arg9[%c0_69, %c0_70, %c0_71] : memref<2x8x16xf32, #tpu.memory_space<vmem>>, vector<2x8x16xf32>
      tpu.vector_store %arg9[%c0_69, %c0_70, %c0_71], %86 {strides = array<i32>} : memref<2x8x16xf32, #tpu.memory_space<vmem>>, vector<2x8x16xf32>,
    } else {
    }
    %c0 = arith.constant 0 : index
    %c0_1 = arith.constant 0 : index
    %c0_2 = arith.constant 0 : index
    %3 = vector.load %arg3[%c0, %c0_1, %c0_2] : memref<2x8x16xf32, #tpu.memory_space<vmem>>, vector<1x8x16xf32>
    %4 = vector.shape_cast %3 : vector<1x8x16xf32> to vector<8x16xf32>
    %c0_3 = arith.constant 0 : index
    %c0_4 = arith.constant 0 : index
    %c0_5 = arith.constant 0 : index
    %5 = vector.load %arg4[%c0_3, %c0_4, %c0_5] : memref<2x8x16xf32, #tpu.memory_space<vmem>>, vector<1x8x16xf32>
    %6 = vector.shape_cast %5 : vector<1x8x16xf32> to vector<8x16xf32>
    %c0_6 = arith.constant 0 : index
    %c0_7 = arith.constant 0 : index
    %c0_8 = arith.constant 0 : index
    %7 = vector.load %arg5[%c0_6, %c0_7, %c0_8] : memref<2x9x16xf32, #tpu.memory_space<vmem>>, vector<1x9x16xf32>
    %8 = vector.shape_cast %7 : vector<1x9x16xf32> to vector<9x16xf32>
    %cst = arith.constant dense<0.000000e+00> : vector<16x16xf32>
    %9 = tpu.matmul %6, %4, %cst {dimension_numbers = #tpu.dot_dimension_numbers<[0], [0], [1], [1], [0, 1, 1, 1], [], []>} : vector<8x16xf32>, vector<8x16xf32>, vector<16x16xf32> -> vector<16x16xf32>
    %c0_9 = arith.constant 0 : index
    %c0_10 = arith.constant 0 : index
    %c0_11 = arith.constant 0 : index
    %10 = vector.load %arg7[%c0_9, %c0_10, %c0_11] : memref<2x1x16xf32, #tpu.memory_space<vmem>>, vector<1x1x16xf32>
    %11 = vector.shape_cast %10 : vector<1x1x16xf32> to vector<1x16xf32>
    %cst_12 = arith.constant dense<0xFF800000> : vector<16xf32>
    %12 = vector.multi_reduction <maximumf>, %9, %cst_12 [0] : vector<16x16xf32> to vector<16xf32>
    %13 = vector.shape_cast %12 : vector<16xf32> to vector<1x16xf32>
    %14 = arith.maximumf %11, %13 : vector<1x16xf32>
    %15 = arith.subf %11, %14 : vector<1x16xf32>
    %16 = math.exp %15 : vector<1x16xf32>
    %17 = vector.broadcast %14 : vector<1x16xf32> to vector<16x16xf32>
    %18 = arith.subf %9, %17 : vector<16x16xf32>
    %19 = math.exp %18 : vector<16x16xf32>
    %cst_13 = arith.constant dense<0.000000e+00> : vector<9x16xf32>
    %20 = tpu.matmul %8, %19, %cst_13 {dimension_numbers = #tpu.dot_dimension_numbers<[1], [0], [0], [1], [0, 0, 1, 1], [], []>} : vector<9x16xf32>, vector<16x16xf32>, vector<9x16xf32> -> vector<9x16xf32>
    %c0_14 = arith.constant 0 : index
    %c0_15 = arith.constant 0 : index
    %c0_16 = arith.constant 0 : index
    %21 = vector.load %arg7[%c0_14, %c0_15, %c0_16] : memref<2x1x16xf32, #tpu.memory_space<vmem>>, vector<1x1x16xf32>
    %22 = vector.shape_cast %21 : vector<1x1x16xf32> to vector<1x16xf32>
    %23 = vector.shape_cast %14 : vector<1x16xf32> to vector<1x1x16xf32>
    tpu.vector_store %arg7[%c0_14, %c0_15, %c0_16], %23 {strides = array<i32>} : memref<2x1x16xf32, #tpu.memory_space<vmem>>, vector<1x1x16xf32>,
    %c0_17 = arith.constant 0 : index
    %c0_18 = arith.constant 0 : index
    %c0_19 = arith.constant 0 : index
    %24 = vector.load %arg8[%c0_17, %c0_18, %c0_19] : memref<2x1x16xf32, #tpu.memory_space<vmem>>, vector<1x1x16xf32>
    %25 = vector.shape_cast %24 : vector<1x1x16xf32> to vector<1x16xf32>
    %26 = arith.mulf %16, %25 : vector<1x16xf32>
    %27 = vector.extract_strided_slice %20 {offsets = [8, 0], sizes = [1, 16], strides = [1, 1]} : vector<9x16xf32> to vector<1x16xf32>
    %28 = arith.addf %26, %27 : vector<1x16xf32>
    %c0_20 = arith.constant 0 : index
    %c0_21 = arith.constant 0 : index
    %c0_22 = arith.constant 0 : index
    %29 = vector.load %arg8[%c0_20, %c0_21, %c0_22] : memref<2x1x16xf32, #tpu.memory_space<vmem>>, vector<1x1x16xf32>
    %30 = vector.shape_cast %29 : vector<1x1x16xf32> to vector<1x16xf32>
    %31 = vector.shape_cast %28 : vector<1x16xf32> to vector<1x1x16xf32>
    tpu.vector_store %arg8[%c0_20, %c0_21, %c0_22], %31 {strides = array<i32>} : memref<2x1x16xf32, #tpu.memory_space<vmem>>, vector<1x1x16xf32>,
    %c0_23 = arith.constant 0 : index
    %c0_24 = arith.constant 0 : index
    %c0_25 = arith.constant 0 : index
    %32 = vector.load %arg9[%c0_23, %c0_24, %c0_25] : memref<2x8x16xf32, #tpu.memory_space<vmem>>, vector<1x8x16xf32>
    %33 = vector.shape_cast %32 : vector<1x8x16xf32> to vector<8x16xf32>
    %34 = vector.broadcast %16 : vector<1x16xf32> to vector<8x16xf32>
    %35 = arith.mulf %34, %33 : vector<8x16xf32>
    %36 = vector.extract_strided_slice %20 {offsets = [0, 0], sizes = [8, 16], strides = [1, 1]} : vector<9x16xf32> to vector<8x16xf32>
    %37 = arith.addf %35, %36 : vector<8x16xf32>
    %c0_26 = arith.constant 0 : index
    %c0_27 = arith.constant 0 : index
    %c0_28 = arith.constant 0 : index
    %38 = vector.load %arg9[%c0_26, %c0_27, %c0_28] : memref<2x8x16xf32, #tpu.memory_space<vmem>>, vector<1x8x16xf32>
    %39 = vector.shape_cast %38 : vector<1x8x16xf32> to vector<8x16xf32>
    %40 = vector.shape_cast %37 : vector<8x16xf32> to vector<1x8x16xf32>
    tpu.vector_store %arg9[%c0_26, %c0_27, %c0_28], %40 {strides = array<i32>} : memref<2x8x16xf32, #tpu.memory_space<vmem>>, vector<1x8x16xf32>,
    %c1 = arith.constant 1 : index
    %c0_29 = arith.constant 0 : index
    %c0_30 = arith.constant 0 : index
    %41 = vector.load %arg3[%c1, %c0_29, %c0_30] : memref<2x8x16xf32, #tpu.memory_space<vmem>>, vector<1x8x16xf32>
    %42 = vector.shape_cast %41 : vector<1x8x16xf32> to vector<8x16xf32>
    %c1_31 = arith.constant 1 : index
    %c0_32 = arith.constant 0 : index
    %c0_33 = arith.constant 0 : index
    %43 = vector.load %arg4[%c1_31, %c0_32, %c0_33] : memref<2x8x16xf32, #tpu.memory_space<vmem>>, vector<1x8x16xf32>
    %44 = vector.shape_cast %43 : vector<1x8x16xf32> to vector<8x16xf32>
    %c1_34 = arith.constant 1 : index
    %c0_35 = arith.constant 0 : index
    %c0_36 = arith.constant 0 : index
    %45 = vector.load %arg5[%c1_34, %c0_35, %c0_36] : memref<2x9x16xf32, #tpu.memory_space<vmem>>, vector<1x9x16xf32>
    %46 = vector.shape_cast %45 : vector<1x9x16xf32> to vector<9x16xf32>
    %cst_37 = arith.constant dense<0.000000e+00> : vector<16x16xf32>
    %47 = tpu.matmul %44, %42, %cst_37 {dimension_numbers = #tpu.dot_dimension_numbers<[0], [0], [1], [1], [0, 1, 1, 1], [], []>} : vector<8x16xf32>, vector<8x16xf32>, vector<16x16xf32> -> vector<16x16xf32>
    %c1_38 = arith.constant 1 : index
    %c0_39 = arith.constant 0 : index
    %c0_40 = arith.constant 0 : index
    %48 = vector.load %arg7[%c1_38, %c0_39, %c0_40] : memref<2x1x16xf32, #tpu.memory_space<vmem>>, vector<1x1x16xf32>
    %49 = vector.shape_cast %48 : vector<1x1x16xf32> to vector<1x16xf32>
    %cst_41 = arith.constant dense<0xFF800000> : vector<16xf32>
    %50 = vector.multi_reduction <maximumf>, %47, %cst_41 [0] : vector<16x16xf32> to vector<16xf32>
    %51 = vector.shape_cast %50 : vector<16xf32> to vector<1x16xf32>
    %52 = arith.maximumf %49, %51 : vector<1x16xf32>
    %53 = arith.subf %49, %52 : vector<1x16xf32>
    %54 = math.exp %53 : vector<1x16xf32>
    %55 = vector.broadcast %52 : vector<1x16xf32> to vector<16x16xf32>
    %56 = arith.subf %47, %55 : vector<16x16xf32>
    %57 = math.exp %56 : vector<16x16xf32>
    %cst_42 = arith.constant dense<0.000000e+00> : vector<9x16xf32>
    %58 = tpu.matmul %46, %57, %cst_42 {dimension_numbers = #tpu.dot_dimension_numbers<[1], [0], [0], [1], [0, 0, 1, 1], [], []>} : vector<9x16xf32>, vector<16x16xf32>, vector<9x16xf32> -> vector<9x16xf32>
    %c1_43 = arith.constant 1 : index
    %c0_44 = arith.constant 0 : index
    %c0_45 = arith.constant 0 : index
    %59 = vector.load %arg7[%c1_43, %c0_44, %c0_45] : memref<2x1x16xf32, #tpu.memory_space<vmem>>, vector<1x1x16xf32>
    %60 = vector.shape_cast %59 : vector<1x1x16xf32> to vector<1x16xf32>
    %61 = vector.shape_cast %52 : vector<1x16xf32> to vector<1x1x16xf32>
    tpu.vector_store %arg7[%c1_43, %c0_44, %c0_45], %61 {strides = array<i32>} : memref<2x1x16xf32, #tpu.memory_space<vmem>>, vector<1x1x16xf32>,
    %c1_46 = arith.constant 1 : index
    %c0_47 = arith.constant 0 : index
    %c0_48 = arith.constant 0 : index
    %62 = vector.load %arg8[%c1_46, %c0_47, %c0_48] : memref<2x1x16xf32, #tpu.memory_space<vmem>>, vector<1x1x16xf32>
    %63 = vector.shape_cast %62 : vector<1x1x16xf32> to vector<1x16xf32>
    %64 = arith.mulf %54, %63 : vector<1x16xf32>
    %65 = vector.extract_strided_slice %58 {offsets = [8, 0], sizes = [1, 16], strides = [1, 1]} : vector<9x16xf32> to vector<1x16xf32>
    %66 = arith.addf %64, %65 : vector<1x16xf32>
    %c1_49 = arith.constant 1 : index
    %c0_50 = arith.constant 0 : index
    %c0_51 = arith.constant 0 : index
    %67 = vector.load %arg8[%c1_49, %c0_50, %c0_51] : memref<2x1x16xf32, #tpu.memory_space<vmem>>, vector<1x1x16xf32>
    %68 = vector.shape_cast %67 : vector<1x1x16xf32> to vector<1x16xf32>
    %69 = vector.shape_cast %66 : vector<1x16xf32> to vector<1x1x16xf32>
    tpu.vector_store %arg8[%c1_49, %c0_50, %c0_51], %69 {strides = array<i32>} : memref<2x1x16xf32, #tpu.memory_space<vmem>>, vector<1x1x16xf32>,
    %c1_52 = arith.constant 1 : index
    %c0_53 = arith.constant 0 : index
    %c0_54 = arith.constant 0 : index
    %70 = vector.load %arg9[%c1_52, %c0_53, %c0_54] : memref<2x8x16xf32, #tpu.memory_space<vmem>>, vector<1x8x16xf32>
    %71 = vector.shape_cast %70 : vector<1x8x16xf32> to vector<8x16xf32>
    %72 = vector.broadcast %54 : vector<1x16xf32> to vector<8x16xf32>
    %73 = arith.mulf %72, %71 : vector<8x16xf32>
    %74 = vector.extract_strided_slice %58 {offsets = [0, 0], sizes = [8, 16], strides = [1, 1]} : vector<9x16xf32> to vector<8x16xf32>
    %75 = arith.addf %73, %74 : vector<8x16xf32>
    %c1_55 = arith.constant 1 : index
    %c0_56 = arith.constant 0 : index
    %c0_57 = arith.constant 0 : index
    %76 = vector.load %arg9[%c1_55, %c0_56, %c0_57] : memref<2x8x16xf32, #tpu.memory_space<vmem>>, vector<1x8x16xf32>
    %77 = vector.shape_cast %76 : vector<1x8x16xf32> to vector<8x16xf32>
    %78 = vector.shape_cast %75 : vector<8x16xf32> to vector<1x8x16xf32>
    tpu.vector_store %arg9[%c1_55, %c0_56, %c0_57], %78 {strides = array<i32>} : memref<2x8x16xf32, #tpu.memory_space<vmem>>, vector<1x8x16xf32>,
    %c0_i32_58 = arith.constant 0 : i32
    %79 = arith.cmpi eq, %arg2, %c0_i32_58 : i32
    %80 = arith.extui %79 : i1 to i32
    %c0_i32_59 = arith.constant 0 : i32
    %81 = arith.cmpi ne, %80, %c0_i32_59 : i32
    scf.if %81 {
      %c0_60 = arith.constant 0 : index
      %c0_61 = arith.constant 0 : index
      %c0_62 = arith.constant 0 : index
      %82 = vector.load %arg8[%c0_60, %c0_61, %c0_62] : memref<2x1x16xf32, #tpu.memory_space<vmem>>, vector<2x1x16xf32>
      %83 = tpu.reciprocal %82 : vector<2x1x16xf32> -> vector<2x1x16xf32>
      %c0_63 = arith.constant 0 : index
      %c0_64 = arith.constant 0 : index
      %c0_65 = arith.constant 0 : index
      %84 = vector.load %arg9[%c0_63, %c0_64, %c0_65] : memref<2x8x16xf32, #tpu.memory_space<vmem>>, vector<2x8x16xf32>
      %85 = vector.broadcast %83 : vector<2x1x16xf32> to vector<2x8x16xf32>
      %86 = arith.mulf %84, %85 : vector<2x8x16xf32>
      %c0_66 = arith.constant 0 : index
      %c0_67 = arith.constant 0 : index
      %c0_68 = arith.constant 0 : index
      %87 = vector.load %arg6[%c0_66, %c0_67, %c0_68] : memref<2x8x16xf32, #tpu.memory_space<vmem>>, vector<2x8x16xf32>
      tpu.vector_store %arg6[%c0_66, %c0_67, %c0_68], %86 {strides = array<i32>} : memref<2x8x16xf32, #tpu.memory_space<vmem>>, vector<2x8x16xf32>,
    } else {
    }
    return
  }
  func.func @transform_0(%arg0: i32, %arg1: i32, %arg2: i32) -> (i32, i32, i32) {
    %c0_i32 = arith.constant 0 : i32
    %c0_i32_0 = arith.constant 0 : i32
    return %arg0, %c0_i32, %arg1 : i32, i32, i32
  }
  func.func @transform_1(%arg0: i32, %arg1: i32, %arg2: i32) -> (i32, i32, i32) {
    %c0_i32 = arith.constant 0 : i32
    %c0_i32_0 = arith.constant 0 : i32
    return %arg0, %c0_i32, %arg2 : i32, i32, i32
  }
  func.func @transform_2(%arg0: i32, %arg1: i32, %arg2: i32) -> (i32, i32, i32) {
    %c0_i32 = arith.constant 0 : i32
    %c0_i32_0 = arith.constant 0 : i32
    return %arg0, %c0_i32, %arg2 : i32, i32, i32
  }
  func.func @transform_3(%arg0: i32, %arg1: i32, %arg2: i32) -> (i32, i32, i32) {
    %c0_i32 = arith.constant 0 : i32
    %c0_i32_0 = arith.constant 0 : i32
    return %arg0, %c0_i32, %arg1 : i32, i32, i32
  }
}

</mosaic_0001>

<llo_original>
// kernel: tpu_custom_call.1
$region0: #{tpu_custom_call.1}
  #allocation0 [shape = 'u32[]', space=smem, size = 0x4, offset = 0x4, fixed_abs, tag = 'smem constant byte address 0x4 - core index']
  #allocation1 [shape = 'u32[144,128]{1,0:T(1,128)}', space=vmem, size = 0x12000, scoped, tag = 'internal scratch']
  #allocation2 [shape = 'f32[2,1,16]{2,1,0:T(1,128)}', space=vmem, size = 0x400, scoped, tag = 'scratch operand']
  #allocation3 [shape = 'f32[2,1,16]{2,1,0:T(1,128)}', space=vmem, size = 0x400, scoped, tag = 'scratch operand']
  #allocation4 [shape = 'f32[2,8,16]{2,1,0:T(8,128)}', space=vmem, size = 0x2000, scoped, tag = 'scratch operand']
  %s0 = inlined_call_operand.vmem [shape: f32[4,8,16], index: 0, kind: input, shape index: {}]
  %s1 = inlined_call_operand.vmem [shape: f32[4,8,16], index: 1, kind: input, shape index: {}]
  %s2 = inlined_call_operand.vmem [shape: f32[4,9,16], index: 2, kind: input, shape index: {}]
  %s3 = inlined_call_operand.hbm [shape: f32[4,8,16], index: 3, kind: output, shape index: {}]
  %s4 = sld [smem:[#allocation0]]
  $region53: #{tpu_custom_call.1} parent=0
    _
  %s6 = ssub.s32 1, %s4
  %s7 = scalar_select 0, %s6, %s4
  $region1: #{tpu_custom_call.1} parent=0
    #allocation5 [shape = 'u8[16384]{0}', space=vmem, size = 0x4000, scoped, tag = 'output window, operand 0']
    #allocation6 [shape = 's32[2]{0}', space=sflag, size = 0x8, scoped, tag = 'scoped memory for tpu_custom_call.1']
    %8 = vsyncpa [#allocation6], 0
    %s9 = scalar_lea.sflag [#allocation6], 1
    %10 = vsyncpa %s9, 0
    loop: start=0, step=1, limit=4
    $region2: #{tpu_custom_call.1} parent=1 // loop_pre_header
      _
    $region3: #{tpu_custom_call.1} parent=1 // loop_header
      %s12 = sphi 0, %s16
      %p13 = scmp.ge.s32.totalorder %s12, 4
      %s19 = sphi 0, %s38
      %s20 = sphi 0, %s34
      %s21 = sphi 0, %s30
      %s22 = sphi 0, %s19
      %s23 = sphi 0, %s20
      %s24 = sphi 0, %s21
      %s25 = sphi 0, %s22
      %s26 = sphi 0, %s23
      %s27 = sphi 0, %s24
      %s43 = sphi 0, %s45
      %s46 = sphi 0, %s43
      %s47 = sphi 0, %s46
      %s63 = sphi 0, %s47
      %s71 = sphi 0, %s73
      %s74 = sphi 0, %s71
      %s75 = sphi 0, %s74
      %s91 = sphi 0, %s75
      %s99 = sphi 0, %s101
      %s102 = sphi 0, %s99
      %s103 = sphi 0, %s102
      %s119 = sphi 0, %s103
      %s127 = sphi 0, %s129
      %s130 = sphi 0, %s127
      %s131 = sphi 0, %s130
      %s147 = sphi 0, %s131
    $region4: #{tpu_custom_call.1} parent=1 // loop_header_branch
      %15 = sbr.rel (%p13) target = $region8
    $region5: #{tpu_custom_call.1} parent=1 // loop_body
      %s17 = ssub.s32 %s12, 1
      %s18 = ssub.s32 %s12, 2
      %s28 = sadd.s32 1, %s21
      %p29 = scmp.ge.s32.totalorder %s28, 1
      %s30 = scalar_select %p29, 0, %s28
      %s31 = sadd.s32 1, %s20
      %s32 = scalar_select %p29, %s31, %s20
      %p33 = scmp.ge.s32.totalorder %s32, 1
      %s34 = scalar_select %p33, 0, %s32
      %s35 = sadd.s32 1, %s19
      %s36 = scalar_select %p33, %s35, %s19
      %p37 = scmp.ge.s32.totalorder %s36, 2
      %s38 = scalar_select %p37, 0, %s36
      %s39 = ssub.s32 %s19, %s38
      %s40 = ssub.s32 %s20, %s34
      %s41 = sor.u32 %s39, %s40
      %p42 = scmp.eq.s32.totalorder %s41, 0
      %s44 = sadd.s32 %s43, 1
      %s45 = scalar_select %p42, %s43, %s44
      %p48 = pneg %p42
      %p49 = scmp.eq.s32.totalorder %s12, 1
      %p50 = por %p48, %p49
      %p51 = scmp.ne.s32.totalorder %s43, %s46
      %p52 = scmp.eq.s32.totalorder %s12, 0
      %p53 = por %p51, %p52
      %p54 = scmp.ne.s32.totalorder %s43, %s46
      %p55 = scmp.eq.s32.totalorder %s17, 1
      %p56 = por %p54, %p55
      %p57 = scmp.ne.s32.totalorder %s46, %s47
      %p58 = scmp.eq.s32.totalorder %s17, 0
      %p59 = por %p57, %p58
      %p60 = scmp.ne.s32.totalorder %s46, %s47
      %p61 = scmp.eq.s32.totalorder %s18, 1
      %p62 = por %p60, %p61
      %p64 = scmp.ne.s32.totalorder %s47, %s63
      %p65 = scmp.eq.s32.totalorder %s18, 0
      %p66 = por %p64, %p65
      %s67 = ssub.s32 %s19, %s38
      %s68 = ssub.s32 %s21, %s30
      %s69 = sor.u32 %s67, %s68
      %p70 = scmp.eq.s32.totalorder %s69, 0
      %s72 = sadd.s32 %s71, 1
      %s73 = scalar_select %p70, %s71, %s72
      %p76 = pneg %p70
      %p77 = scmp.eq.s32.totalorder %s12, 1
      %p78 = por %p76, %p77
      %p79 = scmp.ne.s32.totalorder %s71, %s74
      %p80 = scmp.eq.s32.totalorder %s12, 0
      %p81 = por %p79, %p80
      %p82 = scmp.ne.s32.totalorder %s71, %s74
      %p83 = scmp.eq.s32.totalorder %s17, 1
      %p84 = por %p82, %p83
      %p85 = scmp.ne.s32.totalorder %s74, %s75
      %p86 = scmp.eq.s32.totalorder %s17, 0
      %p87 = por %p85, %p86
      %p88 = scmp.ne.s32.totalorder %s74, %s75
      %p89 = scmp.eq.s32.totalorder %s18, 1
      %p90 = por %p88, %p89
      %p92 = scmp.ne.s32.totalorder %s75, %s91
      %p93 = scmp.eq.s32.totalorder %s18, 0
      %p94 = por %p92, %p93
      %s95 = ssub.s32 %s19, %s38
      %s96 = ssub.s32 %s21, %s30
      %s97 = sor.u32 %s95, %s96
      %p98 = scmp.eq.s32.totalorder %s97, 0
      %s100 = sadd.s32 %s99, 1
      %s101 = scalar_select %p98, %s99, %s100
      %p104 = pneg %p98
      %p105 = scmp.eq.s32.totalorder %s12, 1
      %p106 = por %p104, %p105
      %p107 = scmp.ne.s32.totalorder %s99, %s102
      %p108 = scmp.eq.s32.totalorder %s12, 0
      %p109 = por %p107, %p108
      %p110 = scmp.ne.s32.totalorder %s99, %s102
      %p111 = scmp.eq.s32.totalorder %s17, 1
      %p112 = por %p110, %p111
      %p113 = scmp.ne.s32.totalorder %s102, %s103
      %p114 = scmp.eq.s32.totalorder %s17, 0
      %p115 = por %p113, %p114
      %p116 = scmp.ne.s32.totalorder %s102, %s103
      %p117 = scmp.eq.s32.totalorder %s18, 1
      %p118 = por %p116, %p117
      %p120 = scmp.ne.s32.totalorder %s103, %s119
      %p121 = scmp.eq.s32.totalorder %s18, 0
      %p122 = por %p120, %p121
      %s123 = ssub.s32 %s19, %s38
      %s124 = ssub.s32 %s20, %s34
      %s125 = sor.u32 %s123, %s124
      %p126 = scmp.eq.s32.totalorder %s125, 0
      %s128 = sadd.s32 %s127, 1
      %s129 = scalar_select %p126, %s127, %s128
      %p132 = pneg %p126
      %p133 = scmp.eq.s32.totalorder %s12, 1
      %p134 = por %p132, %p133
      %p135 = scmp.ne.s32.totalorder %s127, %s130
      %p136 = scmp.eq.s32.totalorder %s12, 0
      %p137 = por %p135, %p136
      %p138 = scmp.ne.s32.totalorder %s127, %s130
      %p139 = scmp.eq.s32.totalorder %s17, 1
      %p140 = por %p138, %p139
      %p141 = scmp.ne.s32.totalorder %s130, %s131
      %p142 = scmp.eq.s32.totalorder %s17, 0
      %p143 = por %p141, %p142
      %p144 = scmp.ne.s32.totalorder %s130, %s131
      %p145 = scmp.eq.s32.totalorder %s18, 1
      %p146 = por %p144, %p145
      %p148 = scmp.ne.s32.totalorder %s131, %s147
      %p149 = scmp.eq.s32.totalorder %s18, 0
      %p150 = por %p148, %p149
      %p151 = scmp.le.s32.totalorder 1, %s12
      %p152 = scmp.lt.s32.totalorder %s12, 3
      %p153 = pnand %p151, %p152
      %p154 = pneg %p153
      // Predicated region
      $region9: #{tpu_custom_call.1} parent=5 // pred_check
        _
      $region10: #{tpu_custom_call.1} parent=5 // pred_check_branch
        %156 = sbr.rel (%p153) target = $region12
      $region11: #{tpu_custom_call.1} parent=5 // pred_region
        %s157 = ssub.s32 %s12, 1
      $region12: #{tpu_custom_call.1} parent=5 // pred_fallthru
        _
      %p158 = scmp.lt.s32.totalorder %s12, 2
      // Predicated region
      $region13: #{tpu_custom_call.1} parent=5 // pred_check
        %p159 = pneg %p158
      $region14: #{tpu_custom_call.1} parent=5 // pred_check_branch
        %161 = sbr.rel (%p159) target = $region16
      $region15: #{tpu_custom_call.1} parent=5 // pred_region
        // Predicated region
        $region17: #{tpu_custom_call.1} parent=15 // pred_check
          %p162 = pneg %p53
        $region18: #{tpu_custom_call.1} parent=15 // pred_check_branch
          %164 = sbr.rel (%p162) target = $region20
        $region19: #{tpu_custom_call.1} parent=15 // pred_region
          %s165 = smul.u32 2, %s19
          %p166 = scmp.lt.s32.totalorder %s165, 3
          %s167 = scalar_select %p166, %s165, 3
          %p168 = scmp.lt.s32.totalorder %s20, 0
          %s169 = scalar_select %p168, %s20, 0
          %s170 = sadd.s32 %s169, %s167
          %s171 = smul.addr %s170, 8
          %s172 = scalar_lea.vmem %s0, %s171
          %s173 = smul.u32 2, %s19
        $region20: #{tpu_custom_call.1} parent=15 // pred_fallthru
          _
        // Predicated region
        $region21: #{tpu_custom_call.1} parent=15 // pred_check
          %p174 = pneg %p81
        $region22: #{tpu_custom_call.1} parent=15 // pred_check_branch
          %176 = sbr.rel (%p174) target = $region24
        $region23: #{tpu_custom_call.1} parent=15 // pred_region
          %s177 = smul.u32 2, %s19
          %p178 = scmp.lt.s32.totalorder %s177, 3
          %s179 = scalar_select %p178, %s177, 3
          %p180 = scmp.lt.s32.totalorder %s21, 0
          %s181 = scalar_select %p180, %s21, 0
          %s182 = sadd.s32 %s181, %s179
          %s183 = smul.addr %s182, 8
          %s184 = scalar_lea.vmem %s1, %s183
          %s185 = smul.u32 2, %s19
        $region24: #{tpu_custom_call.1} parent=15 // pred_fallthru
          _
        // Predicated region
        $region25: #{tpu_custom_call.1} parent=15 // pred_check
          %p186 = pneg %p109
        $region26: #{tpu_custom_call.1} parent=15 // pred_check_branch
          %188 = sbr.rel (%p186) target = $region28
        $region27: #{tpu_custom_call.1} parent=15 // pred_region
          %s189 = smul.u32 2, %s19
          %p190 = scmp.lt.s32.totalorder %s189, 3
          %s191 = scalar_select %p190, %s189, 3
          %p192 = scmp.lt.s32.totalorder %s21, 0
          %s193 = scalar_select %p192, %s21, 0
          %s194 = smul.addr %s191, 2
          %s195 = sadd.s32 %s193, %s194
          %s196 = smul.addr %s195, 8
          %s197 = scalar_lea.vmem %s2, %s196
          %s198 = smul.u32 2, %s19
        $region28: #{tpu_custom_call.1} parent=15 // pred_fallthru
          _
      $region16: #{tpu_custom_call.1} parent=5 // pred_fallthru
        _
      %p199 = scmp.le.s32.totalorder 1, %s12
      %p200 = scmp.lt.s32.totalorder %s12, 3
      %p201 = pnand %p199, %p200
      %p202 = pneg %p201
      // Predicated region
      $region29: #{tpu_custom_call.1} parent=5 // pred_check
        _
      $region30: #{tpu_custom_call.1} parent=5 // pred_check_branch
        %204 = sbr.rel (%p201) target = $region32
      $region31: #{tpu_custom_call.1} parent=5 // pred_region
        %s205 = ssub.s32 %s12, 1
        %s206 = smul.u32 2, %s22
        %p207 = scmp.lt.s32.totalorder %s206, 3
        %s208 = scalar_select %p207, %s206, 3
        %p209 = scmp.lt.s32.totalorder %s23, 0
        %s210 = scalar_select %p209, %s23, 0
        %s211 = sadd.s32 %s210, %s208
        %s212 = smul.addr %s211, 8
        %s213 = scalar_lea.vmem %s0, %s212
        %p214 = pneg %p59
        %p215 = pneg %p56
        %s216 = smul.u32 2, %s22
        %p217 = scmp.lt.s32.totalorder %s216, 3
        %s218 = scalar_select %p217, %s216, 3
        %p219 = scmp.lt.s32.totalorder %s24, 0
        %s220 = scalar_select %p219, %s24, 0
        %s221 = sadd.s32 %s220, %s218
        %s222 = smul.addr %s221, 8
        %s223 = scalar_lea.vmem %s1, %s222
        %p224 = pneg %p87
        %p225 = pneg %p84
        %s226 = smul.u32 2, %s22
        %p227 = scmp.lt.s32.totalorder %s226, 3
        %s228 = scalar_select %p227, %s226, 3
        %p229 = scmp.lt.s32.totalorder %s24, 0
        %s230 = scalar_select %p229, %s24, 0
        %s231 = smul.addr %s228, 2
        %s232 = sadd.s32 %s230, %s231
        %s233 = smul.addr %s232, 8
        %s234 = scalar_lea.vmem %s2, %s233
        %p235 = pneg %p115
        %p236 = pneg %p112
        %p237 = pneg %p143
        %p238 = pneg %p140
        %s239 = sand.u32 %s130, 1
        %s240 = scalar_lea.sflag [#allocation6], %s239
        %s241 = sand.u32 %s130, 1
        %s242 = smul.addr %s241, 16
        %s243 = scalar_lea.vmem [#allocation5], %s242
        %s244 = smul.u32 2, %s22
        %p245 = scmp.lt.s32.totalorder %s244, 3
        %s246 = scalar_select %p245, %s244, 3
        %p247 = scmp.lt.s32.totalorder %s23, 0
        %s248 = scalar_select %p247, %s23, 0
        %s249 = sadd.s32 %s248, %s246
        %s250 = smul.addr %s249, 8
        %s251 = scalar_lea.vmem %s0, %s250
        %s252 = smul.u32 2, %s22
        %s253 = smul.u32 2, %s22
        %p254 = scmp.lt.s32.totalorder %s253, 3
        %s255 = scalar_select %p254, %s253, 3
        %p256 = scmp.lt.s32.totalorder %s24, 0
        %s257 = scalar_select %p256, %s24, 0
        %s258 = sadd.s32 %s257, %s255
        %s259 = smul.addr %s258, 8
        %s260 = scalar_lea.vmem %s1, %s259
        %s261 = smul.u32 2, %s22
        %s262 = smul.u32 2, %s22
        %p263 = scmp.lt.s32.totalorder %s262, 3
        %s264 = scalar_select %p263, %s262, 3
        %p265 = scmp.lt.s32.totalorder %s24, 0
        %s266 = scalar_select %p265, %s24, 0
        %s267 = smul.addr %s264, 2
        %s268 = sadd.s32 %s266, %s267
        %s269 = smul.addr %s268, 8
        %s270 = scalar_lea.vmem %s2, %s269
        %s271 = smul.u32 2, %s22
        %s272 = smul.u32 2, %s22
        %p273 = scmp.eq.s32.totalorder %s24, 0
        // Predicated region
        $region33: #{tpu_custom_call.1} parent=31 // pred_check
          %p274 = pneg %p273
        $region34: #{tpu_custom_call.1} parent=31 // pred_check_branch
          %276 = sbr.rel (%p274) target = $region36
        $region35: #{tpu_custom_call.1} parent=31 // pred_region
          %vm277 = vcmask 122880
          %278 = vst.msk [vmem:[#allocation2] sm:$0x1] %vm277, -inf
          %279 = vst.msk [vmem:[#allocation2 + $0x1] sm:$0x1] %vm277, -inf
          %280 = vst.msk [vmem:[#allocation3] sm:$0x1] %vm277, 0.0
          %281 = vst.msk [vmem:[#allocation3 + $0x1] sm:$0x1] %vm277, 0.0
          %vm282 = vcmask 130048
          %283 = vst.msk [vmem:[#allocation4] sm:$0xff] %vm282, 0.0
          %284 = vst.msk [vmem:[#allocation4 + $0x8] sm:$0xff] %vm282, 0.0
        $region36: #{tpu_custom_call.1} parent=31 // pred_fallthru
          _
        %v285 = vld [vmem:[%s251] sm:$0xff]
        %v286 = vld [vmem:[%s260] sm:$0xff]
        %v287 = vld [vmem:[%s270] sm:$0xff]
        %v288 = vld [vmem:[%s270 + $0x8] sm:$0x1]
        %289 = vxpose.xlu0.b32.start [1/16] %v286, 128
        %290 = vxpose.xlu0.b32.cont [2/16] 0.0, 128
        %291 = vxpose.xlu0.b32.cont [3/16] 0.0, 128
        %292 = vxpose.xlu0.b32.cont [4/16] 0.0, 128
        %293 = vxpose.xlu0.b32.cont [5/16] 0.0, 128
        %294 = vxpose.xlu0.b32.cont [6/16] 0.0, 128
        %295 = vxpose.xlu0.b32.cont [7/16] 0.0, 128
        %296 = vxpose.xlu0.b32.cont [8/16] 0.0, 128
        %297 = vxpose.xlu0.b32.cont [9/16] 0.0, 128
        %298 = vxpose.xlu0.b32.cont [10/16] 0.0, 128
        %299 = vxpose.xlu0.b32.cont [11/16] 0.0, 128
        %300 = vxpose.xlu0.b32.cont [12/16] 0.0, 128
        %301 = vxpose.xlu0.b32.cont [13/16] 0.0, 128
        %302 = vxpose.xlu0.b32.cont [14/16] 0.0, 128
        %303 = vxpose.xlu0.b32.cont [15/16] 0.0, 128
        %304 = vxpose.xlu0.b32.end [16/16] 0.0, 128
        %v305 = vpop.trf.xlu0
        %v306 = vpop.trf.xlu0
        %v307 = vpop.trf.xlu0
        %v308 = vpop.trf.xlu0
        %v309 = vpop.trf.xlu0
        %v310 = vpop.trf.xlu0
        %v311 = vpop.trf.xlu0
        %v312 = vpop.trf.xlu0
        %v313 = vpop.trf.xlu0
        %v314 = vpop.trf.xlu0
        %v315 = vpop.trf.xlu0
        %v316 = vpop.trf.xlu0
        %v317 = vpop.trf.xlu0
        %v318 = vpop.trf.xlu0
        %v319 = vpop.trf.xlu0
        %v320 = vpop.trf.xlu0
        %vm321 = vcmask 64512
        %v323 = vsel %vm321, %v305, 0
        %v326 = vsel %vm321, %v306, 0
        %328 = vmatprep.subr.mxu0 0.0
        %329 = vmatpush1.msra.mxu0 0.0
        %330 = vmatprep.subr.mxu0 0.0
        %331 = vmatpush1.msra.mxu0 0.0
        %332 = vmatprep.subr.mxu0 0.0
        %333 = vmatpush1.msra.mxu0 0.0
        %334 = vmatprep.subr.mxu0 0.0
        %335 = vmatpush1.msra.mxu0 0.0
        %336 = vmatprep.subr.mxu0 0.0
        %337 = vmatpush1.msra.mxu0 0.0
        %338 = vmatprep.subr.mxu0 0.0
        %339 = vmatpush1.msra.mxu0 0.0
        %340 = vmatprep.subr.mxu0 0.0
        %341 = vmatpush1.msra.mxu0 0.0
        %342 = vmatprep.subr.mxu0 0.0
        %343 = vmatpush1.msra.mxu0 0.0
        %344 = vmatprep.subr.mxu0 0.0
        %345 = vmatpush1.msra.mxu0 0.0
        %346 = vmatprep.subr.mxu0 0.0
        %347 = vmatpush1.msra.mxu0 0.0
        %348 = vmatprep.subr.mxu0 0.0
        %349 = vmatpush1.msra.mxu0 0.0
        %350 = vmatprep.subr.mxu0 0.0
        %351 = vmatpush1.msra.mxu0 0.0
        %352 = vmatprep.subr.mxu0 0.0
        %353 = vmatpush1.msra.mxu0 0.0
        %354 = vmatprep.subr.mxu0 0.0
        %355 = vmatpush1.msra.mxu0 0.0
        %356 = vmatprep.subr.mxu0 0.0
        %357 = vmatpush1.msra.mxu0 0.0
        %358 = vmatprep.subr.mxu0 0.0
        %359 = vmatpush1.msra.mxu0 %v285
        %360 = vmatprep.subr.mxu0 0.0
        %361 = vmatpush2.msra.mxu0 0.0
        %362 = vmatprep.subr.mxu0 0.0
        %363 = vmatpush2.msra.mxu0 0.0
        %364 = vmatprep.subr.mxu0 0.0
        %365 = vmatpush2.msra.mxu0 0.0
        %366 = vmatprep.subr.mxu0 0.0
        %367 = vmatpush2.msra.mxu0 0.0
        %368 = vmatprep.subr.mxu0 0.0
        %369 = vmatpush2.msra.mxu0 0.0
        %370 = vmatprep.subr.mxu0 0.0
        %371 = vmatpush2.msra.mxu0 0.0
        %372 = vmatprep.subr.mxu0 0.0
        %373 = vmatpush2.msra.mxu0 0.0
        %374 = vmatprep.subr.mxu0 0.0
        %375 = vmatpush2.msra.mxu0 0.0
        %376 = vmatprep.subr.mxu0 0.0
        %377 = vmatpush2.msra.mxu0 0.0
        %378 = vmatprep.subr.mxu0 0.0
        %379 = vmatpush2.msra.mxu0 0.0
        %380 = vmatprep.subr.mxu0 0.0
        %381 = vmatpush2.msra.mxu0 0.0
        %382 = vmatprep.subr.mxu0 0.0
        %383 = vmatpush2.msra.mxu0 0.0
        %384 = vmatprep.subr.mxu0 0.0
        %385 = vmatpush2.msra.mxu0 0.0
        %386 = vmatprep.subr.mxu0 0.0
        %387 = vmatpush2.msra.mxu0 0.0
        %388 = vmatprep.subr.mxu0 0.0
        %389 = vmatpush2.msra.mxu0 0.0
        %390 = vmatprep.subr.mxu0 0.0
        %391 = vmatpush2.msra.mxu0 0.0
        %392 = vmatprep.mubr.f32.mxu0 0.0
        %393 = vmatmul.mubr.f32.gmra.mxu0 %v323
        %v394 = vpop.f32.mrf.mxu0
        %v395 = vadd.f32 0.0, %v394
        %v396 = vpop.f32.mrf.mxu0
        %397 = vmatprep.mubr.f32.mxu0 0.0
        %398 = vmatmul.mubr.f32.gmra.mxu0 %v326
        %v399 = vpop.f32.mrf.mxu0
        %v400 = vadd.f32 0.0, %v399
        %v401 = vpop.f32.mrf.mxu0
        %402 = vdwg.mxu0
        %v403 = vld [vmem:[#allocation2] sm:$0x1]
        %vm404 = vcmask 130048
        %v405 = vsel %vm404, %v395, -inf
        %v406 = vsel %vm404, %v400, -inf
        %v407 = vmax.f32 %v405, %v406
        %v408 = vrot.slane %v407, 4
        %v409 = vmax.f32 %v407, %v408
        %v410 = vrot.slane %v409, 2
        %v411 = vmax.f32 %v409, %v410
        %v412 = vrot.slane %v411, 1
        %v413 = vmax.f32 %v411, %v412
        %v414 = vmax.f32 %v403, %v413
        %v415 = vsub.f32 %v403, %v414
        %v416 = vmul.f32 %v415, 1.442695
        %v417 = vpow.pop %v416
        %v419 = vlaneseq
        %v420 = vshrl.u32 %v419, 7
        %v421 = vsub.s32 0, %v420
        %v422 = vrot.slane %v414, %v421
        %v424 = vsub.f32 %v395, %v422
        %v425 = vsub.f32 %v400, %v422
        %v426 = vmul.f32 %v424, 1.442695
        %v427 = vpow.pop %v426
        %v428 = vmul.f32 %v425, 1.442695
        %v429 = vpow.pop %v428
        %v431 = vsel %vm404, %v287, 0
        %v434 = vsel %vm404, %v288, 0
        %436 = vmatprep.subr.mxu0 0.0
        %437 = vmatpush1.msra.mxu0 0.0
        %438 = vmatprep.subr.mxu0 0.0
        %439 = vmatpush1.msra.mxu0 0.0
        %440 = vmatprep.subr.mxu0 0.0
        %441 = vmatpush1.msra.mxu0 0.0
        %442 = vmatprep.subr.mxu0 0.0
        %443 = vmatpush1.msra.mxu0 0.0
        %444 = vmatprep.subr.mxu0 0.0
        %445 = vmatpush1.msra.mxu0 0.0
        %446 = vmatprep.subr.mxu0 0.0
        %447 = vmatpush1.msra.mxu0 0.0
        %448 = vmatprep.subr.mxu0 0.0
        %449 = vmatpush1.msra.mxu0 0.0
        %450 = vmatprep.subr.mxu0 0.0
        %451 = vmatpush1.msra.mxu0 0.0
        %452 = vmatprep.subr.mxu0 0.0
        %453 = vmatpush1.msra.mxu0 0.0
        %454 = vmatprep.subr.mxu0 0.0
        %455 = vmatpush1.msra.mxu0 0.0
        %456 = vmatprep.subr.mxu0 0.0
        %457 = vmatpush1.msra.mxu0 0.0
        %458 = vmatprep.subr.mxu0 0.0
        %459 = vmatpush1.msra.mxu0 0.0
        %460 = vmatprep.subr.mxu0 0.0
        %461 = vmatpush1.msra.mxu0 0.0
        %462 = vmatprep.subr.mxu0 0.0
        %463 = vmatpush1.msra.mxu0 0.0
        %464 = vmatprep.subr.mxu0 0.0
        %465 = vmatpush1.msra.mxu0 %v429
        %466 = vmatprep.subr.mxu0 0.0
        %467 = vmatpush1.msra.mxu0 %v427
        %468 = vmatprep.subr.mxu0 0.0
        %469 = vmatpush2.msra.mxu0 0.0
        %470 = vmatprep.subr.mxu0 0.0
        %471 = vmatpush2.msra.mxu0 0.0
        %472 = vmatprep.subr.mxu0 0.0
        %473 = vmatpush2.msra.mxu0 0.0
        %474 = vmatprep.subr.mxu0 0.0
        %475 = vmatpush2.msra.mxu0 0.0
        %476 = vmatprep.subr.mxu0 0.0
        %477 = vmatpush2.msra.mxu0 0.0
        %478 = vmatprep.subr.mxu0 0.0
        %479 = vmatpush2.msra.mxu0 0.0
        %480 = vmatprep.subr.mxu0 0.0
        %481 = vmatpush2.msra.mxu0 0.0
        %482 = vmatprep.subr.mxu0 0.0
        %483 = vmatpush2.msra.mxu0 0.0
        %484 = vmatprep.subr.mxu0 0.0
        %485 = vmatpush2.msra.mxu0 0.0
        %486 = vmatprep.subr.mxu0 0.0
        %487 = vmatpush2.msra.mxu0 0.0
        %488 = vmatprep.subr.mxu0 0.0
        %489 = vmatpush2.msra.mxu0 0.0
        %490 = vmatprep.subr.mxu0 0.0
        %491 = vmatpush2.msra.mxu0 0.0
        %492 = vmatprep.subr.mxu0 0.0
        %493 = vmatpush2.msra.mxu0 0.0
        %494 = vmatprep.subr.mxu0 0.0
        %495 = vmatpush2.msra.mxu0 0.0
        %496 = vmatprep.subr.mxu0 0.0
        %497 = vmatpush2.msra.mxu0 0.0
        %498 = vmatprep.subr.mxu0 0.0
        %499 = vmatpush2.msra.mxu0 0.0
        %500 = vmatprep.mubr.f32.mxu0 0.0
        %501 = vmatmul.mubr.f32.gmra.mxu0 %v431
        %v502 = vpop.f32.mrf.mxu0
        %v503 = vadd.f32 0.0, %v502
        %v504 = vpop.f32.mrf.mxu0
        %505 = vmatprep.mubr.f32.mxu0 0.0
        %506 = vmatmul.mubr.f32.gmra.mxu0 %v434
        %v507 = vpop.f32.mrf.mxu0
        %v508 = vadd.f32 0.0, %v507
        %v509 = vpop.f32.mrf.mxu0
        %510 = vdwg.mxu0
        %vm511 = vcmask 122880
        %512 = vst.msk [vmem:[#allocation2] sm:$0x1] %vm511, %v414
        %v513 = vld [vmem:[#allocation3] sm:$0x1]
        %v514 = vmul.f32 %v417, %v513
        %v515 = vadd.f32 %v514, %v508
        %516 = vst.msk [vmem:[#allocation3] sm:$0x1] %vm511, %v515
        %v517 = vld [vmem:[#allocation4] sm:$0xff]
        %v519 = vlaneseq
        %v520 = vshrl.u32 %v519, 7
        %v521 = vsub.s32 0, %v520
        %v522 = vrot.slane %v417, %v521
        %v524 = vmul.f32 %v522, %v517
        %v525 = vadd.f32 %v524, %v503
        %526 = vst.msk [vmem:[#allocation4] sm:$0xff] %vm404, %v525
        %s527 = scalar_lea.vmem %s251, 8
        %v528 = vld [vmem:[%s527] sm:$0xff]
        %s529 = scalar_lea.vmem %s260, 8
        %v530 = vld [vmem:[%s529] sm:$0xff]
        %s531 = scalar_lea.vmem %s270, 16
        %v532 = vld [vmem:[%s531] sm:$0xff]
        %v533 = vld [vmem:[%s531 + $0x8] sm:$0x1]
        %534 = vxpose.xlu0.b32.start [1/16] %v530, 128
        %535 = vxpose.xlu0.b32.cont [2/16] 0.0, 128
        %536 = vxpose.xlu0.b32.cont [3/16] 0.0, 128
        %537 = vxpose.xlu0.b32.cont [4/16] 0.0, 128
        %538 = vxpose.xlu0.b32.cont [5/16] 0.0, 128
        %539 = vxpose.xlu0.b32.cont [6/16] 0.0, 128
        %540 = vxpose.xlu0.b32.cont [7/16] 0.0, 128
        %541 = vxpose.xlu0.b32.cont [8/16] 0.0, 128
        %542 = vxpose.xlu0.b32.cont [9/16] 0.0, 128
        %543 = vxpose.xlu0.b32.cont [10/16] 0.0, 128
        %544 = vxpose.xlu0.b32.cont [11/16] 0.0, 128
        %545 = vxpose.xlu0.b32.cont [12/16] 0.0, 128
        %546 = vxpose.xlu0.b32.cont [13/16] 0.0, 128
        %547 = vxpose.xlu0.b32.cont [14/16] 0.0, 128
        %548 = vxpose.xlu0.b32.cont [15/16] 0.0, 128
        %549 = vxpose.xlu0.b32.end [16/16] 0.0, 128
        %v550 = vpop.trf.xlu0
        %v551 = vpop.trf.xlu0
        %v552 = vpop.trf.xlu0
        %v553 = vpop.trf.xlu0
        %v554 = vpop.trf.xlu0
        %v555 = vpop.trf.xlu0
        %v556 = vpop.trf.xlu0
        %v557 = vpop.trf.xlu0
        %v558 = vpop.trf.xlu0
        %v559 = vpop.trf.xlu0
        %v560 = vpop.trf.xlu0
        %v561 = vpop.trf.xlu0
        %v562 = vpop.trf.xlu0
        %v563 = vpop.trf.xlu0
        %v564 = vpop.trf.xlu0
        %v565 = vpop.trf.xlu0
        %v567 = vsel %vm321, %v550, 0
        %v570 = vsel %vm321, %v551, 0
        %572 = vmatprep.subr.mxu0 0.0
        %573 = vmatpush1.msra.mxu0 0.0
        %574 = vmatprep.subr.mxu0 0.0
        %575 = vmatpush1.msra.mxu0 0.0
        %576 = vmatprep.subr.mxu0 0.0
        %577 = vmatpush1.msra.mxu0 0.0
        %578 = vmatprep.subr.mxu0 0.0
        %579 = vmatpush1.msra.mxu0 0.0
        %580 = vmatprep.subr.mxu0 0.0
        %581 = vmatpush1.msra.mxu0 0.0
        %582 = vmatprep.subr.mxu0 0.0
        %583 = vmatpush1.msra.mxu0 0.0
        %584 = vmatprep.subr.mxu0 0.0
        %585 = vmatpush1.msra.mxu0 0.0
        %586 = vmatprep.subr.mxu0 0.0
        %587 = vmatpush1.msra.mxu0 0.0
        %588 = vmatprep.subr.mxu0 0.0
        %589 = vmatpush1.msra.mxu0 0.0
        %590 = vmatprep.subr.mxu0 0.0
        %591 = vmatpush1.msra.mxu0 0.0
        %592 = vmatprep.subr.mxu0 0.0
        %593 = vmatpush1.msra.mxu0 0.0
        %594 = vmatprep.subr.mxu0 0.0
        %595 = vmatpush1.msra.mxu0 0.0
        %596 = vmatprep.subr.mxu0 0.0
        %597 = vmatpush1.msra.mxu0 0.0
        %598 = vmatprep.subr.mxu0 0.0
        %599 = vmatpush1.msra.mxu0 0.0
        %600 = vmatprep.subr.mxu0 0.0
        %601 = vmatpush1.msra.mxu0 0.0
        %602 = vmatprep.subr.mxu0 0.0
        %603 = vmatpush1.msra.mxu0 %v528
        %604 = vmatprep.subr.mxu0 0.0
        %605 = vmatpush2.msra.mxu0 0.0
        %606 = vmatprep.subr.mxu0 0.0
        %607 = vmatpush2.msra.mxu0 0.0
        %608 = vmatprep.subr.mxu0 0.0
        %609 = vmatpush2.msra.mxu0 0.0
        %610 = vmatprep.subr.mxu0 0.0
        %611 = vmatpush2.msra.mxu0 0.0
        %612 = vmatprep.subr.mxu0 0.0
        %613 = vmatpush2.msra.mxu0 0.0
        %614 = vmatprep.subr.mxu0 0.0
        %615 = vmatpush2.msra.mxu0 0.0
        %616 = vmatprep.subr.mxu0 0.0
        %617 = vmatpush2.msra.mxu0 0.0
        %618 = vmatprep.subr.mxu0 0.0
        %619 = vmatpush2.msra.mxu0 0.0
        %620 = vmatprep.subr.mxu0 0.0
        %621 = vmatpush2.msra.mxu0 0.0
        %622 = vmatprep.subr.mxu0 0.0
        %623 = vmatpush2.msra.mxu0 0.0
        %624 = vmatprep.subr.mxu0 0.0
        %625 = vmatpush2.msra.mxu0 0.0
        %626 = vmatprep.subr.mxu0 0.0
        %627 = vmatpush2.msra.mxu0 0.0
        %628 = vmatprep.subr.mxu0 0.0
        %629 = vmatpush2.msra.mxu0 0.0
        %630 = vmatprep.subr.mxu0 0.0
        %631 = vmatpush2.msra.mxu0 0.0
        %632 = vmatprep.subr.mxu0 0.0
        %633 = vmatpush2.msra.mxu0 0.0
        %634 = vmatprep.subr.mxu0 0.0
        %635 = vmatpush2.msra.mxu0 0.0
        %636 = vmatprep.mubr.f32.mxu0 0.0
        %637 = vmatmul.mubr.f32.gmra.mxu0 %v567
        %v638 = vpop.f32.mrf.mxu0
        %v639 = vadd.f32 0.0, %v638
        %v640 = vpop.f32.mrf.mxu0
        %641 = vmatprep.mubr.f32.mxu0 0.0
        %642 = vmatmul.mubr.f32.gmra.mxu0 %v570
        %v643 = vpop.f32.mrf.mxu0
        %v644 = vadd.f32 0.0, %v643
        %v645 = vpop.f32.mrf.mxu0
        %646 = vdwg.mxu0
        %s647 = scalar_lea.vmem [#allocation2], 1
        %v648 = vld [vmem:[%s647] sm:$0x1]
        %v649 = vsel %vm404, %v639, -inf
        %v650 = vsel %vm404, %v644, -inf
        %v651 = vmax.f32 %v649, %v650
        %v652 = vrot.slane %v651, 4
        %v653 = vmax.f32 %v651, %v652
        %v654 = vrot.slane %v653, 2
        %v655 = vmax.f32 %v653, %v654
        %v656 = vrot.slane %v655, 1
        %v657 = vmax.f32 %v655, %v656
        %v658 = vmax.f32 %v648, %v657
        %v659 = vsub.f32 %v648, %v658
        %v660 = vmul.f32 %v659, 1.442695
        %v661 = vpow.pop %v660
        %v663 = vlaneseq
        %v664 = vshrl.u32 %v663, 7
        %v665 = vsub.s32 0, %v664
        %v666 = vrot.slane %v658, %v665
        %v668 = vsub.f32 %v639, %v666
        %v669 = vsub.f32 %v644, %v666
        %v670 = vmul.f32 %v668, 1.442695
        %v671 = vpow.pop %v670
        %v672 = vmul.f32 %v669, 1.442695
        %v673 = vpow.pop %v672
        %v675 = vsel %vm404, %v532, 0
        %v678 = vsel %vm404, %v533, 0
        %680 = vmatprep.subr.mxu0 0.0
        %681 = vmatpush1.msra.mxu0 0.0
        %682 = vmatprep.subr.mxu0 0.0
        %683 = vmatpush1.msra.mxu0 0.0
        %684 = vmatprep.subr.mxu0 0.0
        %685 = vmatpush1.msra.mxu0 0.0
        %686 = vmatprep.subr.mxu0 0.0
        %687 = vmatpush1.msra.mxu0 0.0
        %688 = vmatprep.subr.mxu0 0.0
        %689 = vmatpush1.msra.mxu0 0.0
        %690 = vmatprep.subr.mxu0 0.0
        %691 = vmatpush1.msra.mxu0 0.0
        %692 = vmatprep.subr.mxu0 0.0
        %693 = vmatpush1.msra.mxu0 0.0
        %694 = vmatprep.subr.mxu0 0.0
        %695 = vmatpush1.msra.mxu0 0.0
        %696 = vmatprep.subr.mxu0 0.0
        %697 = vmatpush1.msra.mxu0 0.0
        %698 = vmatprep.subr.mxu0 0.0
        %699 = vmatpush1.msra.mxu0 0.0
        %700 = vmatprep.subr.mxu0 0.0
        %701 = vmatpush1.msra.mxu0 0.0
        %702 = vmatprep.subr.mxu0 0.0
        %703 = vmatpush1.msra.mxu0 0.0
        %704 = vmatprep.subr.mxu0 0.0
        %705 = vmatpush1.msra.mxu0 0.0
        %706 = vmatprep.subr.mxu0 0.0
        %707 = vmatpush1.msra.mxu0 0.0
        %708 = vmatprep.subr.mxu0 0.0
        %709 = vmatpush1.msra.mxu0 %v673
        %710 = vmatprep.subr.mxu0 0.0
        %711 = vmatpush1.msra.mxu0 %v671
        %712 = vmatprep.subr.mxu0 0.0
        %713 = vmatpush2.msra.mxu0 0.0
        %714 = vmatprep.subr.mxu0 0.0
        %715 = vmatpush2.msra.mxu0 0.0
        %716 = vmatprep.subr.mxu0 0.0
        %717 = vmatpush2.msra.mxu0 0.0
        %718 = vmatprep.subr.mxu0 0.0
        %719 = vmatpush2.msra.mxu0 0.0
        %720 = vmatprep.subr.mxu0 0.0
        %721 = vmatpush2.msra.mxu0 0.0
        %722 = vmatprep.subr.mxu0 0.0
        %723 = vmatpush2.msra.mxu0 0.0
        %724 = vmatprep.subr.mxu0 0.0
        %725 = vmatpush2.msra.mxu0 0.0
        %726 = vmatprep.subr.mxu0 0.0
        %727 = vmatpush2.msra.mxu0 0.0
        %728 = vmatprep.subr.mxu0 0.0
        %729 = vmatpush2.msra.mxu0 0.0
        %730 = vmatprep.subr.mxu0 0.0
        %731 = vmatpush2.msra.mxu0 0.0
        %732 = vmatprep.subr.mxu0 0.0
        %733 = vmatpush2.msra.mxu0 0.0
        %734 = vmatprep.subr.mxu0 0.0
        %735 = vmatpush2.msra.mxu0 0.0
        %736 = vmatprep.subr.mxu0 0.0
        %737 = vmatpush2.msra.mxu0 0.0
        %738 = vmatprep.subr.mxu0 0.0
        %739 = vmatpush2.msra.mxu0 0.0
        %740 = vmatprep.subr.mxu0 0.0
        %741 = vmatpush2.msra.mxu0 0.0
        %742 = vmatprep.subr.mxu0 0.0
        %743 = vmatpush2.msra.mxu0 0.0
        %744 = vmatprep.mubr.f32.mxu0 0.0
        %745 = vmatmul.mubr.f32.gmra.mxu0 %v675
        %v746 = vpop.f32.mrf.mxu0
        %v747 = vadd.f32 0.0, %v746
        %v748 = vpop.f32.mrf.mxu0
        %749 = vmatprep.mubr.f32.mxu0 0.0
        %750 = vmatmul.mubr.f32.gmra.mxu0 %v678
        %v751 = vpop.f32.mrf.mxu0
        %v752 = vadd.f32 0.0, %v751
        %v753 = vpop.f32.mrf.mxu0
        %754 = vdwg.mxu0
        %755 = vst.msk [vmem:[%s647] sm:$0x1] %vm511, %v658
        %s756 = scalar_lea.vmem [#allocation3], 1
        %v757 = vld [vmem:[%s756] sm:$0x1]
        %v758 = vmul.f32 %v661, %v757
        %v759 = vadd.f32 %v758, %v752
        %760 = vst.msk [vmem:[%s756] sm:$0x1] %vm511, %v759
        %s761 = scalar_lea.vmem [#allocation4], 8
        %v762 = vld [vmem:[%s761] sm:$0xff]
        %v764 = vlaneseq
        %v765 = vshrl.u32 %v764, 7
        %v766 = vsub.s32 0, %v765
        %v767 = vrot.slane %v661, %v766
        %v769 = vmul.f32 %v767, %v762
        %v770 = vadd.f32 %v769, %v747
        %771 = vst.msk [vmem:[%s761] sm:$0xff] %vm404, %v770
        // Predicated region
        $region37: #{tpu_custom_call.1} parent=31 // pred_check
          %p772 = pneg %p273
        $region38: #{tpu_custom_call.1} parent=31 // pred_check_branch
          %774 = sbr.rel (%p772) target = $region40
        $region39: #{tpu_custom_call.1} parent=31 // pred_region
          %v775 = vld [vmem:[#allocation3] sm:$0x1]
          %v776 = vld [vmem:[#allocation3 + $0x1] sm:$0x1]
          %v777 = vrcp.pop %v775
          %v778 = vrcp.pop %v776
          %v779 = vld [vmem:[#allocation4] sm:$0xff]
          %v780 = vld [vmem:[#allocation4 + $0x8] sm:$0xff]
          %v783 = vlaneseq
          %v784 = vshrl.u32 %v783, 7
          %v785 = vsub.s32 0, %v784
          %v786 = vrot.slane %v777, %v785
          %v787 = vlaneseq
          %v788 = vshrl.u32 %v787, 7
          %v789 = vsub.s32 0, %v788
          %v790 = vrot.slane %v778, %v789
          %v793 = vmul.f32 %v779, %v786
          %v794 = vmul.f32 %v780, %v790
          %795 = vst.msk [vmem:[%s243] sm:$0xff] %vm404, %v793
          %796 = vst.msk [vmem:[%s243 + $0x8] sm:$0xff] %vm404, %v794
        $region40: #{tpu_custom_call.1} parent=31 // pred_fallthru
          _
        %s797 = sand.u32 %s130, 1
        %s798 = scalar_lea.sflag [#allocation6], %s797
        %s799 = sand.u32 %s130, 1
        %s800 = smul.addr %s799, 16
        %s801 = scalar_lea.vmem [#allocation5], %s800
        // Predicated region
        $region41: #{tpu_custom_call.1} parent=31 // pred_check
          %p802 = pneg %p140
        $region42: #{tpu_custom_call.1} parent=31 // pred_check_branch
          %804 = sbr.rel (%p802) target = $region44
        $region43: #{tpu_custom_call.1} parent=31 // pred_region
          %s805 = smul.u32 2, %s22
          %s807 = ssub.s32 256, 256
          %808 = vsyncadd %s798, %s807
          %s809 = sadd.s32 %s23, %s805
          %s810 = smul.addr %s809, 128
          %s811 = scalar_lea.hbm %s3, %s810
          %s812 = sshll.u32 %s801, 4
          %s813 = int_to_ptr.vmem [resolvable:$true] %s812
          %818 = dma.vmem_to_hbm [thread:$0]  %s813, 256, %s811, %s798, 128, 128, 8
        $region44: #{tpu_custom_call.1} parent=31 // pred_fallthru
          _
      $region32: #{tpu_custom_call.1} parent=5 // pred_fallthru
        _
      %p819 = scmp.le.s32.totalorder 2, %s12
      // Predicated region
      $region45: #{tpu_custom_call.1} parent=5 // pred_check
        %p820 = pneg %p819
      $region46: #{tpu_custom_call.1} parent=5 // pred_check_branch
        %822 = sbr.rel (%p820) target = $region48
      $region47: #{tpu_custom_call.1} parent=5 // pred_region
        %s823 = ssub.s32 %s12, 2
        // Predicated region
        $region49: #{tpu_custom_call.1} parent=47 // pred_check
          %p824 = pneg %p146
        $region50: #{tpu_custom_call.1} parent=47 // pred_check_branch
          %826 = sbr.rel (%p824) target = $region52
        $region51: #{tpu_custom_call.1} parent=47 // pred_region
          %s827 = sand.u32 %s131, 1
          %s828 = scalar_lea.sflag [#allocation6], %s827
          %s829 = sand.u32 %s131, 1
          %s830 = smul.addr %s829, 16
          %s831 = scalar_lea.vmem [#allocation5], %s830
          %832 = dma.done %s828, 256
        $region52: #{tpu_custom_call.1} parent=47 // pred_fallthru
          _
      $region48: #{tpu_custom_call.1} parent=5 // pred_fallthru
        _
    $region6: #{tpu_custom_call.1} parent=1 // loop_footer
      %s16 = sadd.s32 1, %s12
    $region7: #{tpu_custom_call.1} parent=1 // loop_footer_branch
      %11 = sbr.rel target = $region3
    $region8: #{tpu_custom_call.1} parent=1 // loop_exit
      _
    %833 = vsyncpa [#allocation6], 1
    %s834 = scalar_lea.sflag [#allocation6], 1
    %835 = vsyncpa %s834, 1

</llo_original>
